<compile_context>
chip_gen: v6e
topology: v6e:2x2x1
jax: 0.10.0
libtpu: 0.0.40
codegen_flags: <defaults>
</compile_context>

<pallas_src>
import numpy as np
import jax
import jax.numpy as jnp
from jax.experimental import pallas as pl
from jax.experimental.pallas import tpu as pltpu


def _round_up(v, m):
    return ((v + m - 1) // m) * m


def _round_down(v, m):
    return (v // m) * m


def _hfm_kernel(x_ref, a_ref, b_ref, o_ref):
    # x_ref: (TR, L) row tile; a_ref: (L, P) pooling; b_ref: (P, L) upsample.
    x = x_ref[...]                                             # native dtype -> MXU
    pooled = jnp.dot(x, a_ref[...], preferred_element_type=jnp.float32)
    up = jnp.dot(pooled.astype(b_ref.dtype), b_ref[...],
                 preferred_element_type=jnp.float32)
    o_ref[...] = (x.astype(jnp.float32) - up).astype(o_ref.dtype)


def _choose_fold(R, kW, min_lanes=256, max_lanes=4096):
    """Fold g adjacent row-bands into the lane dim so output tiles are lane-dense."""
    if kW >= min_lanes or R <= 1:
        return 1
    divs = [g for g in range(1, R + 1) if R % g == 0 and g * kW <= max_lanes]
    if not divs:
        return 1
    for mod in (256, 128):                      # prefer MXU-friendly lane widths
        for g in divs:
            if g * kW >= min_lanes and (g * kW) % mod == 0:
                return g
    for g in divs:
        if g * kW >= min_lanes:
            return g
    return divs[-1]


def _choose_tile_rows(Rf, L, itemsize, target_bytes):
    """Rows per block: sublane-aligned for dtype, prefer dividing Rf, >=2 grid steps."""
    sub = max(8, 32 // itemsize)                # 8 f32 / 16 bf16 / 32 int8 sublane pack
    if Rf <= sub:
        return Rf                               # full-extent block (always legal)
    tr = max(sub, _round_down(target_bytes // (L * itemsize), sub))
    if tr >= Rf:
        half = _round_up((Rf + 1) // 2, sub)    # split in two for megacore chips
        return half if half < Rf else Rf
    for cand in range(tr, sub - 1, -sub):       # largest sub-multiple dividing Rf
        if Rf % cand == 0:
            if 2 * cand >= tr:                  # only if it doesn't shrink tiles too much
                tr = cand
            break
    return tr


_WEIGHT_CACHE = {}


def _get_weights(k, W, g, dtype):
    """Block-diagonal (over g folded bands) pooling / upsample matrices, cached."""
    key = (int(k), int(W), int(g), jnp.dtype(dtype).name)
    hit = _WEIGHT_CACHE.get(key)
    if hit is not None:
        return hit
    kW, Wk = k * W, W // k
    wblk = (np.arange(kW) % W) // k                             # pool column per flat pos
    a_band = (wblk[:, None] == np.arange(Wk)[None, :]).astype(np.float32) / float(k * k)
    b_band = (np.arange(Wk)[:, None] == wblk[None, :]).astype(np.float32)
    A = np.zeros((g * kW, g * Wk), np.float32)
    Bu = np.zeros((g * Wk, g * kW), np.float32)
    for j in range(g):
        A[j * kW:(j + 1) * kW, j * Wk:(j + 1) * Wk] = a_band
        Bu[j * Wk:(j + 1) * Wk, j * kW:(j + 1) * kW] = b_band
    npdt = jnp.dtype(dtype)
    out = (jnp.asarray(A.astype(npdt)), jnp.asarray(Bu.astype(npdt)))
    _WEIGHT_CACHE[key] = out
    return out


def hfm(x, k=2, target_block_bytes=4 * 1024 * 1024):
    """out = x - upsample_nearest(avg_pool2d(x, k, k), k)   (HFM.forward), NCHW x."""
    B, C, H, W = x.shape
    assert H % k == 0 and W % k == 0, "h, w must be divisible by k"
    kW, Wk = k * W, W // k
    R = B * C * (H // k)                          # independent k-row bands
    itemsize = jnp.dtype(x.dtype).itemsize

    # Lane densification for small kW (free, contiguous reshape).
    g = _choose_fold(R, kW)
    Rf, L, P = R // g, g * kW, g * Wk
    x2 = x.reshape(Rf, L)

    # Weights: bf16/f16 when x is bf16/f16 (1/k^2 exact for power-of-2 k), f32 for f32 x.
    w_dtype = jnp.float32 if jnp.dtype(x.dtype) == jnp.dtype(jnp.float32) else x.dtype
    A, Bu = _get_weights(k, W, g, w_dtype)
    w_bytes = 2 * L * P * jnp.dtype(w_dtype).itemsize

    tr = _choose_tile_rows(Rf, L, itemsize, target_block_bytes)

    def vmem_needed(t):
        blk = t * L * itemsize
        f32_tmp = 2 * t * L * 4 + 2 * t * P * 4   # up/x f32 temps + pooled
        return 4 * blk + f32_tmp + 2 * w_bytes + (4 << 20)

    VMEM_CAP = 48 * 2**20                          # headroom under v7x's 64 MiB VMEM
    while vmem_needed(tr) > VMEM_CAP and tr >= 16:
        tr = max(8, _round_down(tr // 2, 8))
    need = vmem_needed(tr)
    vmem_limit = int(need if need > VMEM_CAP else max(32 * 2**20, min(need, VMEM_CAP)))

    grid = (pl.cdiv(Rf, tr),)
    cost = pl.CostEstimate(
        flops=int(4 * Rf * L * P + Rf * L),
        transcendentals=0,
        bytes_accessed=int(2 * Rf * L * itemsize + w_bytes),
    )

    out2 = pl.pallas_call(
        _hfm_kernel,
        out_shape=jax.ShapeDtypeStruct((Rf, L), x.dtype),
        grid_spec=pltpu.PrefetchScalarGridSpec(
            num_scalar_prefetch=0,
            grid=grid,
            in_specs=[
                pl.BlockSpec((tr, L), lambda r: (r, 0)),   # x row tile
                pl.BlockSpec((L, P), lambda r: (0, 0)),    # pooling matrix (constant)
                pl.BlockSpec((P, L), lambda r: (0, 0)),    # upsample matrix (constant)
            ],
            out_specs=pl.BlockSpec((tr, L), lambda r: (r, 0)),
        ),
        compiler_params=pltpu.CompilerParams(
            dimension_semantics=("parallel",),
            vmem_limit_bytes=vmem_limit,
        ),
        cost_estimate=cost,
    )(x2, A, Bu)

    return out2.reshape(B, C, H, W)


def hfm_ref(x, k=2):
    # Pure-JAX reference mirroring the PyTorch module.
    B, C, H, W = x.shape
    pooled = x.reshape(B, C, H // k, k, W // k, k).mean(axis=(3, 5))
    up = jnp.repeat(jnp.repeat(pooled, k, axis=2), k, axis=3)
    return x - up


if __name__ == "__main__":
    k = 2
    key0, key1 = jax.random.split(jax.random.PRNGKey(0))

    # Main test (small-kW folded path: kW=32 -> g=8, 256-lane tiles).
    x = jax.random.normal(key0, (2, 4, 16, 16), dtype=jnp.float32)
    out = hfm(x, k=k)
    jax.block_until_ready(out)
    ref = hfm_ref(x, k=k)
    assert out.shape == x.shape and out.dtype == x.dtype
    # Default (non-HIGHEST) MXU precision uses bf16 passes for f32 inputs -> loose tol.
    assert jnp.allclose(out, ref, atol=5e-2, rtol=5e-2), float(jnp.max(jnp.abs(out - ref)))

    # Wide-row path (kW=256 -> g=1, factored A/Bup).
    x2 = jax.random.normal(key1, (1, 2, 8, 128), dtype=jnp.float32)
    out2 = hfm(x2, k=k)
    jax.block_until_ready(out2)
    ref2 = hfm_ref(x2, k=k)
    assert jnp.allclose(out2, ref2, atol=5e-2, rtol=5e-2), float(jnp.max(jnp.abs(out2 - ref2)))

    print("KERNEL_OK")
</pallas_src>

<mosaic_0001>
module attributes {stable_mosaic.version = 11 : i64} {
  func.func @_hfm_kernel(%arg0: i32, %arg1: memref<8x256xf32, #tpu.memory_space<vmem>>, %arg2: memref<256x64xf32, #tpu.memory_space<vmem>>, %arg3: memref<64x256xf32, #tpu.memory_space<vmem>>, %arg4: memref<8x256xf32, #tpu.memory_space<vmem>>) attributes {dimension_semantics = [#tpu.dimension_semantics<parallel>], iteration_bounds = array<i64: 1>, scalar_prefetch = 0 : i64, scratch_operands = 0 : i64, tpu.core_type = #tpu.core_type<tc>, window_params = [{transform_indices = @transform_0, window_bounds = array<i64: 8, 256>}, {pipeline_mode = #tpu.pipeline_mode<synchronous>, transform_indices = @transform_1, window_bounds = array<i64: 256, 64>}, {pipeline_mode = #tpu.pipeline_mode<synchronous>, transform_indices = @transform_2, window_bounds = array<i64: 64, 256>}, {transform_indices = @transform_3, window_bounds = array<i64: 8, 256>}]} {
    %c0 = arith.constant 0 : index
    %c0_0 = arith.constant 0 : index
    %0 = vector.load %arg1[%c0, %c0_0] : memref<8x256xf32, #tpu.memory_space<vmem>>, vector<8x256xf32>
    %c0_1 = arith.constant 0 : index
    %c0_2 = arith.constant 0 : index
    %1 = vector.load %arg2[%c0_1, %c0_2] : memref<256x64xf32, #tpu.memory_space<vmem>>, vector<256x64xf32>
    %cst = arith.constant dense<0.000000e+00> : vector<8x64xf32>
    %2 = tpu.matmul %0, %1, %cst {dimension_numbers = #tpu.dot_dimension_numbers<[1], [0], [0], [1], [0, 0, 1, 1], [], []>} : vector<8x256xf32>, vector<256x64xf32>, vector<8x64xf32> -> vector<8x64xf32>
    %c0_3 = arith.constant 0 : index
    %c0_4 = arith.constant 0 : index
    %3 = vector.load %arg3[%c0_3, %c0_4] : memref<64x256xf32, #tpu.memory_space<vmem>>, vector<64x256xf32>
    %cst_5 = arith.constant dense<0.000000e+00> : vector<8x256xf32>
    %4 = tpu.matmul %2, %3, %cst_5 {dimension_numbers = #tpu.dot_dimension_numbers<[1], [0], [0], [1], [0, 0, 1, 1], [], []>} : vector<8x64xf32>, vector<64x256xf32>, vector<8x256xf32> -> vector<8x256xf32>
    %5 = arith.subf %0, %4 : vector<8x256xf32>
    %c0_6 = arith.constant 0 : index
    %c0_7 = arith.constant 0 : index
    %6 = vector.load %arg4[%c0_6, %c0_7] : memref<8x256xf32, #tpu.memory_space<vmem>>, vector<8x256xf32>
    tpu.vector_store %arg4[%c0_6, %c0_7], %5 {strides = array<i32>} : memref<8x256xf32, #tpu.memory_space<vmem>>, vector<8x256xf32>,
    return
  }
  func.func @transform_0(%arg0: i32) -> (i32, i32) {
    %c0_i32 = arith.constant 0 : i32
    %c0_i32_0 = arith.constant 0 : i32
    return %arg0, %c0_i32 : i32, i32
  }
  func.func @transform_1(%arg0: i32) -> (i32, i32) {
    %c0_i32 = arith.constant 0 : i32
    %c0_i32_0 = arith.constant 0 : i32
    %c0_i32_1 = arith.constant 0 : i32
    return %c0_i32, %c0_i32_0 : i32, i32
  }
  func.func @transform_2(%arg0: i32) -> (i32, i32) {
    %c0_i32 = arith.constant 0 : i32
    %c0_i32_0 = arith.constant 0 : i32
    %c0_i32_1 = arith.constant 0 : i32
    return %c0_i32, %c0_i32_0 : i32, i32
  }
  func.func @transform_3(%arg0: i32) -> (i32, i32) {
    %c0_i32 = arith.constant 0 : i32
    %c0_i32_0 = arith.constant 0 : i32
    return %arg0, %c0_i32 : i32, i32
  }
}

</mosaic_0001>

<llo_original>
// kernel: tpu_custom_call.1
$region0: #{tpu_custom_call.1}
  #allocation0 [shape = 'u32[]', space=smem, size = 0x4, offset = 0x4, fixed_abs, tag = 'smem constant byte address 0x4 - core index']
  #allocation1 [shape = 'u32[144,128]{1,0:T(1,128)}', space=vmem, size = 0x12000, scoped, tag = 'internal scratch']
  %s0 = inlined_call_operand.vmem [shape: f32[8,256], index: 0, kind: input, shape index: {}]
  %s1 = inlined_call_operand.vmem [shape: f32[256,64], index: 1, kind: input, shape index: {}]
  %s2 = inlined_call_operand.vmem [shape: f32[64,256], index: 2, kind: input, shape index: {}]
  %s3 = inlined_call_operand.hbm [shape: f32[8,256], index: 3, kind: output, shape index: {}]
  %s4 = sld [smem:[#allocation0]]
  $region22: #{tpu_custom_call.1} parent=0
    _
  %s6 = ssub.s32 1, %s4
  %s7 = scalar_select 0, %s6, %s4
  $region1: #{tpu_custom_call.1} parent=0
    #allocation2 [shape = 'u8[8192]{0}', space=vmem, size = 0x2000, scoped, tag = 'output window, operand 0, single buffered']
    #allocation3 [shape = 's32[1]{0}', space=sflag, size = 0x4, scoped, tag = 'scoped memory for tpu_custom_call.1']
    %8 = vsyncpa [#allocation3], 0
    // Predicated region
    $region2: #{tpu_custom_call.1} parent=1 // pred_check
      _
    $region3: #{tpu_custom_call.1} parent=1 // pred_check_branch
      %10 = sbr.rel (0) target = $region5
    $region4: #{tpu_custom_call.1} parent=1 // pred_region
      _
    $region5: #{tpu_custom_call.1} parent=1 // pred_fallthru
      _
    // Predicated region
    $region6: #{tpu_custom_call.1} parent=1 // pred_check
      _
    $region7: #{tpu_custom_call.1} parent=1 // pred_check_branch
      %12 = sbr.rel (0) target = $region9
    $region8: #{tpu_custom_call.1} parent=1 // pred_region
      _
    $region9: #{tpu_custom_call.1} parent=1 // pred_fallthru
      _
    // Predicated region
    $region10: #{tpu_custom_call.1} parent=1 // pred_check
      _
    $region11: #{tpu_custom_call.1} parent=1 // pred_check_branch
      %14 = sbr.rel (0) target = $region13
    $region12: #{tpu_custom_call.1} parent=1 // pred_region
      _
    $region13: #{tpu_custom_call.1} parent=1 // pred_fallthru
      _
    %v15 = vld [vmem:[%s0] sm:$0xff]
    %v16 = vld [vmem:[%s0 + $0x8] sm:$0xff]
    %v17 = vld [vmem:[%s1] sm:$0xff]
    %v18 = vld [vmem:[%s1 + $0x8] sm:$0xff]
    %v19 = vld [vmem:[%s1 + $0x10] sm:$0xff]
    %v20 = vld [vmem:[%s1 + $0x18] sm:$0xff]
    %v21 = vld [vmem:[%s1 + $0x20] sm:$0xff]
    %v22 = vld [vmem:[%s1 + $0x28] sm:$0xff]
    %v23 = vld [vmem:[%s1 + $0x30] sm:$0xff]
    %v24 = vld [vmem:[%s1 + $0x38] sm:$0xff]
    %v25 = vld [vmem:[%s1 + $0x40] sm:$0xff]
    %v26 = vld [vmem:[%s1 + $0x48] sm:$0xff]
    %v27 = vld [vmem:[%s1 + $0x50] sm:$0xff]
    %v28 = vld [vmem:[%s1 + $0x58] sm:$0xff]
    %v29 = vld [vmem:[%s1 + $0x60] sm:$0xff]
    %v30 = vld [vmem:[%s1 + $0x68] sm:$0xff]
    %v31 = vld [vmem:[%s1 + $0x70] sm:$0xff]
    %v32 = vld [vmem:[%s1 + $0x78] sm:$0xff]
    %v33 = vld [vmem:[%s1 + $0x80] sm:$0xff]
    %v34 = vld [vmem:[%s1 + $0x88] sm:$0xff]
    %v35 = vld [vmem:[%s1 + $0x90] sm:$0xff]
    %v36 = vld [vmem:[%s1 + $0x98] sm:$0xff]
    %v37 = vld [vmem:[%s1 + $0xa0] sm:$0xff]
    %v38 = vld [vmem:[%s1 + $0xa8] sm:$0xff]
    %v39 = vld [vmem:[%s1 + $0xb0] sm:$0xff]
    %v40 = vld [vmem:[%s1 + $0xb8] sm:$0xff]
    %v41 = vld [vmem:[%s1 + $0xc0] sm:$0xff]
    %v42 = vld [vmem:[%s1 + $0xc8] sm:$0xff]
    %v43 = vld [vmem:[%s1 + $0xd0] sm:$0xff]
    %v44 = vld [vmem:[%s1 + $0xd8] sm:$0xff]
    %v45 = vld [vmem:[%s1 + $0xe0] sm:$0xff]
    %v46 = vld [vmem:[%s1 + $0xe8] sm:$0xff]
    %v47 = vld [vmem:[%s1 + $0xf0] sm:$0xff]
    %v48 = vld [vmem:[%s1 + $0xf8] sm:$0xff]
    %49 = vmatprep.subr.mxu0 0.0
    %50 = vmatpush1.msra.mxu0 %v32
    %51 = vmatprep.subr.mxu0 0.0
    %52 = vmatpush1.msra.mxu0 %v31
    %53 = vmatprep.subr.mxu0 0.0
    %54 = vmatpush1.msra.mxu0 %v30
    %55 = vmatprep.subr.mxu0 0.0
    %56 = vmatpush1.msra.mxu0 %v29
    %57 = vmatprep.subr.mxu0 0.0
    %58 = vmatpush1.msra.mxu0 %v28
    %59 = vmatprep.subr.mxu0 0.0
    %60 = vmatpush1.msra.mxu0 %v27
    %61 = vmatprep.subr.mxu0 0.0
    %62 = vmatpush1.msra.mxu0 %v26
    %63 = vmatprep.subr.mxu0 0.0
    %64 = vmatpush1.msra.mxu0 %v25
    %65 = vmatprep.subr.mxu0 0.0
    %66 = vmatpush1.msra.mxu0 %v24
    %67 = vmatprep.subr.mxu0 0.0
    %68 = vmatpush1.msra.mxu0 %v23
    %69 = vmatprep.subr.mxu0 0.0
    %70 = vmatpush1.msra.mxu0 %v22
    %71 = vmatprep.subr.mxu0 0.0
    %72 = vmatpush1.msra.mxu0 %v21
    %73 = vmatprep.subr.mxu0 0.0
    %74 = vmatpush1.msra.mxu0 %v20
    %75 = vmatprep.subr.mxu0 0.0
    %76 = vmatpush1.msra.mxu0 %v19
    %77 = vmatprep.subr.mxu0 0.0
    %78 = vmatpush1.msra.mxu0 %v18
    %79 = vmatprep.subr.mxu0 0.0
    %80 = vmatpush1.msra.mxu0 %v17
    %81 = vmatprep.subr.mxu0 0.0
    %82 = vmatpush2.msra.mxu0 %v48
    %83 = vmatprep.subr.mxu0 0.0
    %84 = vmatpush2.msra.mxu0 %v47
    %85 = vmatprep.subr.mxu0 0.0
    %86 = vmatpush2.msra.mxu0 %v46
    %87 = vmatprep.subr.mxu0 0.0
    %88 = vmatpush2.msra.mxu0 %v45
    %89 = vmatprep.subr.mxu0 0.0
    %90 = vmatpush2.msra.mxu0 %v44
    %91 = vmatprep.subr.mxu0 0.0
    %92 = vmatpush2.msra.mxu0 %v43
    %93 = vmatprep.subr.mxu0 0.0
    %94 = vmatpush2.msra.mxu0 %v42
    %95 = vmatprep.subr.mxu0 0.0
    %96 = vmatpush2.msra.mxu0 %v41
    %97 = vmatprep.subr.mxu0 0.0
    %98 = vmatpush2.msra.mxu0 %v40
    %99 = vmatprep.subr.mxu0 0.0
    %100 = vmatpush2.msra.mxu0 %v39
    %101 = vmatprep.subr.mxu0 0.0
    %102 = vmatpush2.msra.mxu0 %v38
    %103 = vmatprep.subr.mxu0 0.0
    %104 = vmatpush2.msra.mxu0 %v37
    %105 = vmatprep.subr.mxu0 0.0
    %106 = vmatpush2.msra.mxu0 %v36
    %107 = vmatprep.subr.mxu0 0.0
    %108 = vmatpush2.msra.mxu0 %v35
    %109 = vmatprep.subr.mxu0 0.0
    %110 = vmatpush2.msra.mxu0 %v34
    %111 = vmatprep.subr.mxu0 0.0
    %112 = vmatpush2.msra.mxu0 %v33
    %113 = vmatprep.mubr.f32.mxu0 %v16
    %114 = vmatmul.mubr.f32.gmra.mxu0 %v15
    %v115 = vpop.f32.mrf.mxu0
    %v116 = vadd.f32 0.0, %v115
    %v117 = vpop.f32.mrf.mxu0
    %118 = vdwg.mxu0
    %v119 = vld [vmem:[%s2] sm:$0xff]
    %v120 = vld [vmem:[%s2 + $0x8] sm:$0xff]
    %v121 = vld [vmem:[%s2 + $0x10] sm:$0xff]
    %v122 = vld [vmem:[%s2 + $0x18] sm:$0xff]
    %v123 = vld [vmem:[%s2 + $0x20] sm:$0xff]
    %v124 = vld [vmem:[%s2 + $0x28] sm:$0xff]
    %v125 = vld [vmem:[%s2 + $0x30] sm:$0xff]
    %v126 = vld [vmem:[%s2 + $0x38] sm:$0xff]
    %v127 = vld [vmem:[%s2 + $0x40] sm:$0xff]
    %v128 = vld [vmem:[%s2 + $0x48] sm:$0xff]
    %v129 = vld [vmem:[%s2 + $0x50] sm:$0xff]
    %v130 = vld [vmem:[%s2 + $0x58] sm:$0xff]
    %v131 = vld [vmem:[%s2 + $0x60] sm:$0xff]
    %v132 = vld [vmem:[%s2 + $0x68] sm:$0xff]
    %v133 = vld [vmem:[%s2 + $0x70] sm:$0xff]
    %v134 = vld [vmem:[%s2 + $0x78] sm:$0xff]
    %vm135 = vcmask 523264
    %v137 = vsel %vm135, %v116, 0
    %139 = vmatprep.subr.mxu0 0.0
    %140 = vmatpush1.msra.mxu0 0.0
    %141 = vmatprep.subr.mxu0 0.0
    %142 = vmatpush1.msra.mxu0 0.0
    %143 = vmatprep.subr.mxu0 0.0
    %144 = vmatpush1.msra.mxu0 0.0
    %145 = vmatprep.subr.mxu0 0.0
    %146 = vmatpush1.msra.mxu0 0.0
    %147 = vmatprep.subr.mxu0 0.0
    %148 = vmatpush1.msra.mxu0 0.0
    %149 = vmatprep.subr.mxu0 0.0
    %150 = vmatpush1.msra.mxu0 0.0
    %151 = vmatprep.subr.mxu0 0.0
    %152 = vmatpush1.msra.mxu0 0.0
    %153 = vmatprep.subr.mxu0 0.0
    %154 = vmatpush1.msra.mxu0 0.0
    %155 = vmatprep.subr.mxu0 %v134
    %156 = vmatpush1.msra.mxu0 %v133
    %157 = vmatprep.subr.mxu0 %v132
    %158 = vmatpush1.msra.mxu0 %v131
    %159 = vmatprep.subr.mxu0 %v130
    %160 = vmatpush1.msra.mxu0 %v129
    %161 = vmatprep.subr.mxu0 %v128
    %162 = vmatpush1.msra.mxu0 %v127
    %163 = vmatprep.subr.mxu0 %v126
    %164 = vmatpush1.msra.mxu0 %v125
    %165 = vmatprep.subr.mxu0 %v124
    %166 = vmatpush1.msra.mxu0 %v123
    %167 = vmatprep.subr.mxu0 %v122
    %168 = vmatpush1.msra.mxu0 %v121
    %169 = vmatprep.subr.mxu0 %v120
    %170 = vmatpush1.msra.mxu0 %v119
    %171 = vmatprep.subr.mxu0 0.0
    %172 = vmatpush2.msra.mxu0 0.0
    %173 = vmatprep.subr.mxu0 0.0
    %174 = vmatpush2.msra.mxu0 0.0
    %175 = vmatprep.subr.mxu0 0.0
    %176 = vmatpush2.msra.mxu0 0.0
    %177 = vmatprep.subr.mxu0 0.0
    %178 = vmatpush2.msra.mxu0 0.0
    %179 = vmatprep.subr.mxu0 0.0
    %180 = vmatpush2.msra.mxu0 0.0
    %181 = vmatprep.subr.mxu0 0.0
    %182 = vmatpush2.msra.mxu0 0.0
    %183 = vmatprep.subr.mxu0 0.0
    %184 = vmatpush2.msra.mxu0 0.0
    %185 = vmatprep.subr.mxu0 0.0
    %186 = vmatpush2.msra.mxu0 0.0
    %187 = vmatprep.subr.mxu0 0.0
    %188 = vmatpush2.msra.mxu0 0.0
    %189 = vmatprep.subr.mxu0 0.0
    %190 = vmatpush2.msra.mxu0 0.0
    %191 = vmatprep.subr.mxu0 0.0
    %192 = vmatpush2.msra.mxu0 0.0
    %193 = vmatprep.subr.mxu0 0.0
    %194 = vmatpush2.msra.mxu0 0.0
    %195 = vmatprep.subr.mxu0 0.0
    %196 = vmatpush2.msra.mxu0 0.0
    %197 = vmatprep.subr.mxu0 0.0
    %198 = vmatpush2.msra.mxu0 0.0
    %199 = vmatprep.subr.mxu0 0.0
    %200 = vmatpush2.msra.mxu0 0.0
    %201 = vmatprep.subr.mxu0 0.0
    %202 = vmatpush2.msra.mxu0 0.0
    %203 = vmatprep.mubr.f32.mxu0 0.0
    %204 = vmatmul.mubr.f32.gmra.mxu0 %v137
    %v205 = vpop.f32.mrf.mxu0
    %v206 = vadd.f32 0.0, %v205
    %v207 = vpop.f32.mrf.mxu0
    %v208 = vadd.f32 0.0, %v207
    %209 = vdwg.mxu0
    %v210 = vsub.f32 %v15, %v206
    %v211 = vsub.f32 %v16, %v208
    %212 = vst [vmem:[#allocation2] sm:$0xff] %v210
    %213 = vst [vmem:[#allocation2 + $0x8] sm:$0xff] %v211
    // Predicated region
    $region14: #{tpu_custom_call.1} parent=1 // pred_check
      _
    $region15: #{tpu_custom_call.1} parent=1 // pred_check_branch
      %215 = sbr.rel (0) target = $region17
    $region16: #{tpu_custom_call.1} parent=1 // pred_region
      %s217 = ssub.s32 256, 256
      %218 = vsyncadd [#allocation3], %s217
      %s220 = sshll.u32 [#allocation2], 4
      %s221 = int_to_ptr.vmem [resolvable:$true] %s220
      %223 = dma.vmem_to_hbm [thread:$0]  %s221, 256, %s3, [#allocation3]
    $region17: #{tpu_custom_call.1} parent=1 // pred_fallthru
      _
    // Predicated region
    $region18: #{tpu_custom_call.1} parent=1 // pred_check
      _
    $region19: #{tpu_custom_call.1} parent=1 // pred_check_branch
      %225 = sbr.rel (0) target = $region21
    $region20: #{tpu_custom_call.1} parent=1 // pred_region
      %226 = dma.done [#allocation3], 256
    $region21: #{tpu_custom_call.1} parent=1 // pred_fallthru
      _
    %227 = vsyncpa [#allocation3], 1

</llo_original>
